<compile_context>
chip_gen: v7x
topology: tpu7x:2x2x1
jax: 0.10.0
libtpu: 0.0.40
codegen_flags: <defaults>
</compile_context>

<pallas_src>
import functools

import jax
import jax.numpy as jnp
from jax.experimental import pallas as pl
from jax.experimental.pallas import tpu as pltpu


def _round_up(x: int, m: int) -> int:
    return ((x + m - 1) // m) * m


def _pick_row_tile(n: int, tile_rows: int) -> int:
    """Row tile: multiple of 8 sublanes, <= tile_rows, and (for large N) small
    enough that the grid has >= 4 steps so the DMA pipeline can overlap."""
    tm = min(tile_rows, _round_up(n, 8))
    while tm > 128 and (n + tm - 1) // tm < 4:
        tm = _round_up(tm // 2, 8)
    return max(tm, 8)


# --------------------------------------------------------------------------
# Kernel 1: fused Linear + log_softmax (dim=1)
#   logits = x @ W^T + b ; out = logits - max - log(sum(exp(logits - max)))
# --------------------------------------------------------------------------
def _clustering_head_kernel(x_ref, wt_ref, b_ref, o_ref):
    # MXU matmul in the operands' storage dtype (bf16 by default), f32 accumulate.
    x = x_ref[...].astype(wt_ref.dtype)                     # in-kernel cast: cheap VPU op
    logits = jnp.dot(x, wt_ref[...],
                     preferred_element_type=jnp.float32)    # (tm, Kp) on MXU
    logits = logits + b_ref[...]                            # f32 bias; padded lanes = -1e30

    # log_softmax over the cluster (lane) axis, all in f32.
    m = jnp.max(logits, axis=-1, keepdims=True)             # (tm, 1)
    s = logits - m
    lse = jnp.log(jnp.sum(jnp.exp(s), axis=-1, keepdims=True))
    o_ref[...] = (s - lse).astype(o_ref.dtype)              # padded lanes sliced off outside


@functools.partial(jax.jit, static_argnames=("num_clusters", "tile_rows"))
def clustering_head_forward(x, wt_padded, bias_padded, *, num_clusters,
                            tile_rows: int = 512):
    """x: (N, D); wt_padded: (D, Kp) pre-transposed, lane-padded weight;
    bias_padded: (1, Kp) with -1e30 in padded lanes.  -> (N, K) f32 log-probs."""
    n, d = x.shape
    k_pad = wt_padded.shape[1]

    tm = _pick_row_tile(n, tile_rows)
    grid = (pl.cdiv(n, tm),)                                 # ragged last tile masked by Pallas

    # VMEM budget: double-buffered x/out tiles + resident W^T/bias (+ margin).
    vmem_needed = 2 * (tm * d * x.dtype.itemsize
                       + d * k_pad * wt_padded.dtype.itemsize
                       + k_pad * 4
                       + tm * k_pad * 4)
    vmem_limit = int(min(100 * 2 ** 20, max(2 * vmem_needed, 32 * 2 ** 20)))
    # TODO(synk): for very large D*Kp (resident weight > ~20 MiB, esp. v7x's
    # 64 MiB VMEM) add a D-contraction grid axis ("arbitrary") with an f32
    # accumulator scratch and run the log-softmax epilogue under pl.when(last).

    cost = pl.CostEstimate(
        flops=2 * n * d * k_pad + 6 * n * k_pad,
        transcendentals=n * k_pad + n,                        # exp per logit + log per row
        bytes_accessed=(n * d * x.dtype.itemsize
                        + d * k_pad * wt_padded.dtype.itemsize
                        + 4 * k_pad
                        + 4 * n * k_pad),
    )

    out = pl.pallas_call(
        _clustering_head_kernel,
        out_shape=jax.ShapeDtypeStruct((n, k_pad), jnp.float32),
        grid_spec=pltpu.PrefetchScalarGridSpec(
            num_scalar_prefetch=0,
            grid=grid,
            in_specs=[
                pl.BlockSpec((tm, d), lambda i: (i, 0)),      # x row tile (streams)
                pl.BlockSpec((d, k_pad), lambda i: (0, 0)),   # W^T resident across grid
                pl.BlockSpec((1, k_pad), lambda i: (0, 0)),   # bias resident across grid
            ],
            out_specs=pl.BlockSpec((tm, k_pad), lambda i: (i, 0)),  # lane-dense stores
        ),
        compiler_params=pltpu.CompilerParams(
            dimension_semantics=("parallel",),                # rows shard across TCs on v7x
            vmem_limit_bytes=vmem_limit,
        ),
        cost_estimate=cost,
    )(x, wt_padded, bias_padded)

    if k_pad != num_clusters:
        out = out[:, :num_clusters]                           # slice only the tiny (N, K) output
    return out


# --------------------------------------------------------------------------
# Kernel 2: KL divergence, reduction='batchmean'
#   kl = (1/N) * sum_ij  p_ij * (log p_ij - logq_ij),  with 0*log0 := 0
#   (predictions are already in log-space, matching nn.KLDivLoss semantics)
# --------------------------------------------------------------------------
def _kl_div_kernel(logq_ref, p_ref, o_ref, *, n_rows, block_rows):
    i = pl.program_id(0)

    @pl.when(i == 0)
    def _():
        o_ref[0, 0] = jnp.float32(0.0)                        # resident SMEM accumulator

    logq = logq_ref[...].astype(jnp.float32)
    p = p_ref[...].astype(jnp.float32)
    # Mask both the ragged (out-of-bounds) tail rows of the last tile and
    # zero-target entries (0 * log 0 := 0, matching nn.KLDivLoss).
    row = jax.lax.broadcasted_iota(jnp.int32, p.shape, 0) + i * block_rows
    valid = (row < n_rows) & (p > 0.0)
    term = jnp.where(valid, p * (jnp.log(jnp.maximum(p, 1e-38)) - logq), 0.0)
    o_ref[0, 0] += jnp.sum(term)


@functools.partial(jax.jit, static_argnames=("tile_rows",))
def kl_div_batchmean(predictions, targets, *, tile_rows: int = 512):
    """KLDivLoss(reduction='batchmean'); predictions already in log-space."""
    n, k = predictions.shape
    tm = _pick_row_tile(n, tile_rows)
    grid = (pl.cdiv(n, tm),)

    total = pl.pallas_call(
        functools.partial(_kl_div_kernel, n_rows=n, block_rows=tm),
        out_shape=jax.ShapeDtypeStruct((1, 1), jnp.float32),
        grid_spec=pltpu.PrefetchScalarGridSpec(
            num_scalar_prefetch=0,
            grid=grid,
            in_specs=[pl.BlockSpec((tm, k), lambda i: (i, 0)),
                      pl.BlockSpec((tm, k), lambda i: (i, 0))],
            out_specs=pl.BlockSpec((1, 1), lambda i: (0, 0),
                                   memory_space=pltpu.SMEM),
        ),
        compiler_params=pltpu.CompilerParams(
            dimension_semantics=("arbitrary",),               # sequential accumulation
        ),
    )(predictions, targets)
    return total[0, 0] / jnp.float32(n)


# --------------------------------------------------------------------------
# ClusteringHead wrapper (mirrors the PyTorch module's API).
# --------------------------------------------------------------------------
class ClusteringHead:
    """Soft cluster assignments: log_softmax(Linear(x), dim=1) + KLDiv loss."""

    def __init__(self, input_dim: int, num_clusters: int, key=None,
                 custom_nn=None, default_loss=None, compute_dtype=jnp.bfloat16):
        # TODO(synk): custom_nn (arbitrary user nn.Module) has no Pallas
        # equivalent; only the default nn.Linear path is implemented here.
        if custom_nn is not None:
            raise NotImplementedError("custom_nn is not supported in the Pallas port")
        if key is None:
            key = jax.random.PRNGKey(0)
        kw, kb = jax.random.split(key)
        bound = 1.0 / float(input_dim) ** 0.5                 # nn.Linear default init
        self.weight = jax.random.uniform(kw, (num_clusters, input_dim),
                                         jnp.float32, -bound, bound)
        self.bias = jax.random.uniform(kb, (num_clusters,), jnp.float32, -bound, bound)
        self.input_dim = input_dim
        self.num_clusters = num_clusters
        self._custom_loss = default_loss                      # callable(pred, tgt) or None

        # One-time layout work (NOT per forward call):
        #  * pre-transpose to (D, K): cluster axis becomes the lane axis,
        #  * pad K up to a multiple of 128 lanes (zero weight cols, -1e30 bias)
        #    so stores are unmasked and MXU columns are fully used,
        #  * store the matmul operand in compute_dtype (bf16 default) for a
        #    native single-pass MXU matmul and half the weight HBM/VMEM traffic.
        k_pad = _round_up(num_clusters, 128)
        wt = jnp.zeros((input_dim, k_pad), dtype=compute_dtype)
        wt = wt.at[:, :num_clusters].set(self.weight.T.astype(compute_dtype))
        b2 = jnp.full((1, k_pad), -1e30, dtype=jnp.float32)
        b2 = b2.at[0, :num_clusters].set(self.bias)
        self._wt_padded = wt
        self._bias_padded = b2

    def forward(self, x):
        return clustering_head_forward(x, self._wt_padded, self._bias_padded,
                                       num_clusters=self.num_clusters)

    def __call__(self, x):
        return self.forward(x)

    def loss(self, predictions, targets):
        if self._custom_loss is not None:
            return self._custom_loss(predictions, targets)
        return kl_div_batchmean(predictions, targets)


# --------------------------------------------------------------------------
if __name__ == "__main__":
    key = jax.random.PRNGKey(0)
    kx, khead, kt = jax.random.split(key, 3)

    batch, input_dim, num_clusters = 16, 32, 8
    x = jax.random.normal(kx, (batch, input_dim), jnp.float32)

    head = ClusteringHead(input_dim, num_clusters, key=khead)

    # forward
    log_probs = jax.block_until_ready(head(x))
    assert log_probs.shape == (batch, num_clusters)
    assert bool(jnp.all(jnp.isfinite(log_probs)))

    # Reference: f32 log_softmax(x @ W^T + b). bf16 MXU operands -> loose tol.
    ref = jax.nn.log_softmax(x @ head.weight.T + head.bias, axis=1)
    assert bool(jnp.allclose(log_probs, ref, atol=3e-2, rtol=3e-2))
    # Rows must sum to 1 in probability space (softmax math itself is f32).
    assert bool(jnp.allclose(jnp.sum(jnp.exp(log_probs), axis=1), 1.0, atol=1e-5))

    # KLDivLoss(reduction='batchmean') against the kernel's own log-probs.
    targets = jax.nn.softmax(
        jax.random.normal(kt, (batch, num_clusters), jnp.float32), axis=1)
    loss = jax.block_until_ready(head.loss(log_probs, targets))
    ref_loss = jnp.sum(targets * (jnp.log(targets) - log_probs)) / batch
    assert bool(jnp.allclose(loss, ref_loss, atol=1e-5, rtol=1e-5))

    print("KERNEL_OK")
</pallas_src>

<mosaic_0001>
module attributes {stable_mosaic.version = 11 : i64} {
  func.func @_clustering_head_kernel(%arg0: i32, %arg1: memref<16x32xf32, #tpu.memory_space<vmem>>, %arg2: memref<32x128xbf16, #tpu.memory_space<vmem>>, %arg3: memref<1x128xf32, #tpu.memory_space<vmem>>, %arg4: memref<16x128xf32, #tpu.memory_space<vmem>>) attributes {dimension_semantics = [#tpu.dimension_semantics<parallel>], iteration_bounds = array<i64: 1>, scalar_prefetch = 0 : i64, scratch_operands = 0 : i64, tpu.core_type = #tpu.core_type<tc>, window_params = [{transform_indices = @transform_0, window_bounds = array<i64: 16, 32>}, {pipeline_mode = #tpu.pipeline_mode<synchronous>, transform_indices = @transform_1, window_bounds = array<i64: 32, 128>}, {pipeline_mode = #tpu.pipeline_mode<synchronous>, transform_indices = @transform_2, window_bounds = array<i64: 1, 128>}, {transform_indices = @transform_3, window_bounds = array<i64: 16, 128>}]} {
    %c0 = arith.constant 0 : index
    %c0_0 = arith.constant 0 : index
    %0 = vector.load %arg1[%c0, %c0_0] : memref<16x32xf32, #tpu.memory_space<vmem>>, vector<16x32xf32>
    %1 = arith.truncf %0 : vector<16x32xf32> to vector<16x32xbf16>
    %c0_1 = arith.constant 0 : index
    %c0_2 = arith.constant 0 : index
    %2 = vector.load %arg2[%c0_1, %c0_2] : memref<32x128xbf16, #tpu.memory_space<vmem>>, vector<32x128xbf16>
    %cst = arith.constant dense<0.000000e+00> : vector<16x128xf32>
    %3 = tpu.matmul %1, %2, %cst {dimension_numbers = #tpu.dot_dimension_numbers<[1], [0], [0], [1], [0, 0, 1, 1], [], []>} : vector<16x32xbf16>, vector<32x128xbf16>, vector<16x128xf32> -> vector<16x128xf32>
    %c0_3 = arith.constant 0 : index
    %c0_4 = arith.constant 0 : index
    %4 = vector.load %arg3[%c0_3, %c0_4] : memref<1x128xf32, #tpu.memory_space<vmem>>, vector<1x128xf32>
    %5 = vector.broadcast %4 : vector<1x128xf32> to vector<16x128xf32>
    %6 = arith.addf %3, %5 : vector<16x128xf32>
    %cst_5 = arith.constant dense<0xFF800000> : vector<16xf32>
    %7 = vector.multi_reduction <maximumf>, %6, %cst_5 [1] : vector<16x128xf32> to vector<16xf32>
    %8 = vector.shape_cast %7 : vector<16xf32> to vector<16x1xf32>
    %9 = vector.broadcast %8 : vector<16x1xf32> to vector<16x128xf32>
    %10 = arith.subf %6, %9 : vector<16x128xf32>
    %11 = math.exp %10 : vector<16x128xf32>
    %cst_6 = arith.constant dense<0.000000e+00> : vector<16xf32>
    %12 = vector.multi_reduction <add>, %11, %cst_6 [1] : vector<16x128xf32> to vector<16xf32>
    %13 = vector.shape_cast %12 : vector<16xf32> to vector<16x1xf32>
    %14 = math.log %13 : vector<16x1xf32>
    %15 = vector.broadcast %14 : vector<16x1xf32> to vector<16x128xf32>
    %16 = arith.subf %10, %15 : vector<16x128xf32>
    %c0_7 = arith.constant 0 : index
    %c0_8 = arith.constant 0 : index
    %17 = vector.load %arg4[%c0_7, %c0_8] : memref<16x128xf32, #tpu.memory_space<vmem>>, vector<16x128xf32>
    tpu.vector_store %arg4[%c0_7, %c0_8], %16 {strides = array<i32>} : memref<16x128xf32, #tpu.memory_space<vmem>>, vector<16x128xf32>,
    return
  }
  func.func @transform_0(%arg0: i32) -> (i32, i32) {
    %c0_i32 = arith.constant 0 : i32
    %c0_i32_0 = arith.constant 0 : i32
    return %arg0, %c0_i32 : i32, i32
  }
  func.func @transform_1(%arg0: i32) -> (i32, i32) {
    %c0_i32 = arith.constant 0 : i32
    %c0_i32_0 = arith.constant 0 : i32
    %c0_i32_1 = arith.constant 0 : i32
    return %c0_i32, %c0_i32_0 : i32, i32
  }
  func.func @transform_2(%arg0: i32) -> (i32, i32) {
    %c0_i32 = arith.constant 0 : i32
    %c0_i32_0 = arith.constant 0 : i32
    %c0_i32_1 = arith.constant 0 : i32
    return %c0_i32, %c0_i32_0 : i32, i32
  }
  func.func @transform_3(%arg0: i32) -> (i32, i32) {
    %c0_i32 = arith.constant 0 : i32
    %c0_i32_0 = arith.constant 0 : i32
    return %arg0, %c0_i32 : i32, i32
  }
}

</mosaic_0001>

<llo_original>
// kernel: clustering_head_forward.1
$region0: #{clustering_head_forward.1}
  #allocation0 [shape = 'u32[]', space=smem, size = 0x4, offset = 0x4, fixed_abs, tag = 'smem constant byte address 0x4 - core index']
  #allocation1 [shape = 'u32[144,128]{1,0:T(1,128)}', space=vmem, size = 0x12000, scoped, tag = 'internal scratch']
  %s0 = inlined_call_operand.hbm [shape: f32[16,32], index: 0, kind: input, shape index: {}]
  %s1 = inlined_call_operand.hbm [shape: bf16[32,128], index: 1, kind: input, shape index: {}]
  %s2 = inlined_call_operand.vmem [shape: f32[1,128], index: 2, kind: input, shape index: {}]
  %s3 = inlined_call_operand.vmem [shape: f32[16,128], index: 3, kind: output, shape index: {}]
  %s4 = sld [smem:[#allocation0]]
  $region30: #{clustering_head_forward.1} parent=0
    _
  %s6 = ssub.s32 1, %s4
  %s7 = scalar_select 0, %s6, %s4
  $region1: #{clustering_head_forward.1} parent=0
    #allocation2 [shape = 'u8[8192]{0}', space=vmem, size = 0x2000, scoped, tag = 'input window, operand 0, single buffered']
    #allocation3 [shape = 's32[1]{0}', space=sflag, size = 0x4, scoped, tag = 'scoped memory for clustering_head_forward.1']
    #allocation4 [shape = 'u8[8192]{0}', space=vmem, size = 0x2000, scoped, tag = 'input window, operand 1, single buffered']
    #allocation5 [shape = 's32[1]{0}', space=sflag, size = 0x4, scoped, tag = 'scoped memory for clustering_head_forward.1']
    %8 = vsyncpa [#allocation3], 0
    %9 = vsyncpa [#allocation5], 0
    // Predicated region
    $region2: #{clustering_head_forward.1} parent=1 // pred_check
      _
    $region3: #{clustering_head_forward.1} parent=1 // pred_check_branch
      %11 = sbr.rel (0) target = $region5
    $region4: #{clustering_head_forward.1} parent=1 // pred_region
      %s13 = ssub.s32 256, 256
      %14 = vsyncadd [#allocation3], %s13
      %s15 = sshll.u32 [#allocation2], 4
      %s16 = int_to_ptr.vmem [resolvable:$true] %s15
      %21 = dma.hbm_to_vmem [thread:$0]  %s0, 256, %s16, [#allocation3], 128, 128, 8
    $region5: #{clustering_head_forward.1} parent=1 // pred_fallthru
      _
    // Predicated region
    $region6: #{clustering_head_forward.1} parent=1 // pred_check
      _
    $region7: #{clustering_head_forward.1} parent=1 // pred_check_branch
      %23 = sbr.rel (0) target = $region9
    $region8: #{clustering_head_forward.1} parent=1 // pred_region
      %s25 = ssub.s32 256, 256
      %26 = vsyncadd [#allocation5], %s25
      %s27 = sshll.u32 [#allocation4], 4
      %s28 = int_to_ptr.vmem [resolvable:$true] %s27
      %33 = dma.hbm_to_vmem [thread:$0]  %s1, 256, %s28, [#allocation5], 64, 64, 4
    $region9: #{clustering_head_forward.1} parent=1 // pred_fallthru
      _
    // Predicated region
    $region10: #{clustering_head_forward.1} parent=1 // pred_check
      _
    $region11: #{clustering_head_forward.1} parent=1 // pred_check_branch
      %35 = sbr.rel (0) target = $region13
    $region12: #{clustering_head_forward.1} parent=1 // pred_region
      _
    $region13: #{clustering_head_forward.1} parent=1 // pred_fallthru
      _
    // Predicated region
    $region14: #{clustering_head_forward.1} parent=1 // pred_check
      _
    $region15: #{clustering_head_forward.1} parent=1 // pred_check_branch
      %37 = sbr.rel (0) target = $region17
    $region16: #{clustering_head_forward.1} parent=1 // pred_region
      %38 = dma.done [#allocation3], 256
    $region17: #{clustering_head_forward.1} parent=1 // pred_fallthru
      _
    // Predicated region
    $region18: #{clustering_head_forward.1} parent=1 // pred_check
      _
    $region19: #{clustering_head_forward.1} parent=1 // pred_check_branch
      %40 = sbr.rel (0) target = $region21
    $region20: #{clustering_head_forward.1} parent=1 // pred_region
      %41 = dma.done [#allocation5], 256
    $region21: #{clustering_head_forward.1} parent=1 // pred_fallthru
      _
    %v43 = vld [vmem:[#allocation2] sm:$0xff]
    %v44 = vld [vmem:[#allocation2 + $0x8] sm:$0xff]
    %v45 = vpack.c.bf16 %v44, %v43
    %v46 = vld [vmem:[#allocation4] sm:$0xf]
    %v47 = vld [vmem:[#allocation4 + $0x4] sm:$0xf]
    %v48 = vld [vmem:[#allocation4 + $0x8] sm:$0xf]
    %v49 = vld [vmem:[#allocation4 + $0xc] sm:$0xf]
    %v50 = vld [vmem:[%s2] sm:$0x1]
    %v52 = vlaneseq
    %v53 = vshrl.u32 %v52, 7
    %v54 = vsub.s32 0, %v53
    %v55 = vrot.slane %v50, %v54
    %v61 = vunpack.c.l.b16 %v46
    %v62 = vunpack.c.l.b16 %v47
    %v63 = vunpack.c.l.b16 %v48
    %v64 = vunpack.c.l.b16 %v49
    %v65 = vpack.c.b16 %v62, %v61
    %v66 = vpack.c.b16 %v64, %v63
    %vm69 = vcmask 261120
    %v71 = vsel %vm69, %v45, 0
    %73 = vmatprep.subr.bf16.mxu0 0
    %74 = vmatpush1.bf16.msra.mxu0 %v65
    %75 = vmatprep.subr.bf16.mxu0 0
    %76 = vmatpush1.bf16.msra.mxu0 %v66
    %77 = vmatprep.subr.bf16.mxu0 0
    %78 = vmatpush1.bf16.msra.mxu0 0
    %79 = vmatprep.subr.bf16.mxu0 0
    %80 = vmatpush1.bf16.msra.mxu0 0
    %81 = vmatprep.subr.bf16.mxu0 0
    %82 = vmatpush1.bf16.msra.mxu0 0
    %83 = vmatprep.subr.bf16.mxu0 0
    %84 = vmatpush1.bf16.msra.mxu0 0
    %85 = vmatprep.subr.bf16.mxu0 0
    %86 = vmatpush1.bf16.msra.mxu0 0
    %87 = vmatprep.subr.bf16.mxu0 0
    %88 = vmatpush1.bf16.msra.mxu0 0
    %89 = vmatprep.subr.bf16.mxu0 0
    %90 = vmatpush1.bf16.msra.mxu0 0
    %91 = vmatprep.subr.bf16.mxu0 0
    %92 = vmatpush1.bf16.msra.mxu0 0
    %93 = vmatprep.subr.bf16.mxu0 0
    %94 = vmatpush1.bf16.msra.mxu0 0
    %95 = vmatprep.subr.bf16.mxu0 0
    %96 = vmatpush1.bf16.msra.mxu0 0
    %97 = vmatprep.subr.bf16.mxu0 0
    %98 = vmatpush1.bf16.msra.mxu0 0
    %99 = vmatprep.subr.bf16.mxu0 0
    %100 = vmatpush1.bf16.msra.mxu0 0
    %101 = vmatprep.subr.bf16.mxu0 0
    %102 = vmatpush1.bf16.msra.mxu0 0
    %103 = vmatprep.subr.bf16.mxu0 0
    %104 = vmatpush1.bf16.msra.mxu0 0
    %105 = vmatprep.mubr.bf16.mxu0 0
    %106 = vmatmul.mubr.bf16.gmra.mrb[0].mxu0 %v71
    %v107 = vpop.f32.mrb[0].mxu0
    %v108 = vadd.f32 %v55, %v107
    %v109 = vpop.f32.mrb[0].mxu0
    %v110 = vpop.f32.mrb[0].mxu0
    %v111 = vadd.f32 %v55, %v110
    %v112 = vpop.f32.mrb[0].mxu0
    %113 = vdwg.mxu0
    %114 = vmax.xlane.f32.xlu0 %v108
    %v115 = vpop.xlane.xlu0 %114
    %116 = vmax.xlane.f32.xlu0 %v111
    %v117 = vpop.xlane.xlu0 %116
    %v118 = vsub.f32 %v108, %v115
    %v119 = vsub.f32 %v111, %v117
    %v120 = vmul.f32 %v118, 1.442695
    %v121 = vpow.pop %v120
    %v122 = vmul.f32 %v119, 1.442695
    %v123 = vpow.pop %v122
    %124 = vadd.xlane.f32.xlu0 %v121
    %v125 = vpop.xlane.xlu0 %124
    %126 = vadd.xlane.f32.xlu0 %v123
    %v127 = vpop.xlane.xlu0 %126
    %v128 = vlog2.pop %v125
    %v129 = vmul.f32 %v128, 0.6931472
    %v130 = vlog2.pop %v127
    %v131 = vmul.f32 %v130, 0.6931472
    %v132 = vsub.f32 %v118, %v129
    %v133 = vsub.f32 %v119, %v131
    %134 = vst [vmem:[%s3] sm:$0xff] %v132
    %135 = vst [vmem:[%s3 + $0x8] sm:$0xff] %v133
    // Predicated region
    $region22: #{clustering_head_forward.1} parent=1 // pred_check
      _
    $region23: #{clustering_head_forward.1} parent=1 // pred_check_branch
      %137 = sbr.rel (0) target = $region25
    $region24: #{clustering_head_forward.1} parent=1 // pred_region
      _
    $region25: #{clustering_head_forward.1} parent=1 // pred_fallthru
      _
    // Predicated region
    $region26: #{clustering_head_forward.1} parent=1 // pred_check
      _
    $region27: #{clustering_head_forward.1} parent=1 // pred_check_branch
      %139 = sbr.rel (0) target = $region29
    $region28: #{clustering_head_forward.1} parent=1 // pred_region
      _
    $region29: #{clustering_head_forward.1} parent=1 // pred_fallthru
      _
    %140 = vsyncpa [#allocation3], 1
    %141 = vsyncpa [#allocation5], 1

</llo_original>
